<compile_context>
chip_gen: v6e
topology: v6e:2x2x1
jax: 0.10.0
libtpu: 0.0.40
codegen_flags: <defaults>
</compile_context>

<pallas_src>
import jax
import jax.numpy as jnp
from jax.experimental import pallas as pl
from jax.experimental.pallas import tpu as pltpu


def _round_up(n, m):
    return ((n + m - 1) // m) * m


def _cts_policy_kernel(x_ref, w1_ref, b1_ref, w2_ref, b2_ref,
                       w3_ref, b3_ref, means_ref):
    """Fused MLP forward for one batch tile: two tanh hidden layers + mean head.

    Weights/biases are VMEM-resident across the whole grid (constant index_map);
    only x / means tiles stream per grid step. Matmuls accumulate in f32 on the
    MXU regardless of the input dtype; activations run in f32.
    """
    x = x_ref[...]

    # Hidden layer 1: (TB, S) @ (S, H1) + (1, H1) -> tanh  (f32 accumulate)
    h1 = jnp.tanh(
        jnp.dot(x, w1_ref[...], preferred_element_type=jnp.float32) + b1_ref[...]
    )

    # Hidden layer 2: (TB, H1) @ (H1, H2) + (1, H2) -> tanh
    h2 = jnp.tanh(
        jnp.dot(h1.astype(w2_ref.dtype), w2_ref[...],
                preferred_element_type=jnp.float32) + b2_ref[...]
    )

    # Mean head into the lane-dense (TB, A_pad) output tile; padded columns of
    # w3/b3 are zero so the extra lanes carry zeros and are sliced off outside.
    means_ref[...] = (
        jnp.dot(h2.astype(w3_ref.dtype), w3_ref[...],
                preferred_element_type=jnp.float32) + b3_ref[...]
    )


def cts_policy_forward(x, params, *, block_batch=512, use_bf16=False):
    """Run the CtsPolicy forward pass on TPU via a fused, batch-tiled Pallas kernel.

    Args:
      x: (batch, state_dim) float32.
      params: dict with
        w1 (state_dim, H1), b1 (1, H1),
        w2 (H1, H2),        b2 (1, H2),
        w3 (H2, action_dim), b3 (1, action_dim),
        log_stdev (1, action_dim)
        (weights stored transposed, i.e. (in_features, out_features)).
      block_batch: batch tile size for large rollout batches (multiple of 8).
      use_bf16: cast x and weights to bf16 (f32 accumulation) — v6e / v7x only.

    Returns:
      (means, std): means (batch, action_dim) f32, std (action_dim,) f32,
      matching the PyTorch module's return signature.
    """
    B, S = x.shape
    H1 = params["w1"].shape[1]
    H2 = params["w2"].shape[1]
    A = params["w3"].shape[1]

    # Lane-dense output: pad the means last dim up to a multiple of 128.
    A_pad = _round_up(A, 128)
    w3p = jnp.zeros((H2, A_pad), params["w3"].dtype).at[:, :A].set(params["w3"])
    b3p = jnp.zeros((1, A_pad), params["b3"].dtype).at[:, :A].set(params["b3"])

    # Batch tiling: TB multiple of 8, grid over padded batch.
    TB = min(_round_up(max(block_batch, 8), 8), _round_up(B, 8))
    B_pad = _round_up(B, TB)
    x_p = x if B_pad == B else jnp.zeros((B_pad, S), x.dtype).at[:B].set(x)

    w1, b1 = params["w1"], params["b1"]
    w2, b2 = params["w2"], params["b2"]
    if use_bf16:
        # Halve x's HBM traffic and take the native bf16 MXU path (v6e / v7x).
        x_p = x_p.astype(jnp.bfloat16)
        w1 = w1.astype(jnp.bfloat16)
        w2 = w2.astype(jnp.bfloat16)
        w3p = w3p.astype(jnp.bfloat16)

    grid = (B_pad // TB,)
    itemsize = jnp.dtype(x_p.dtype).itemsize
    cost = pl.CostEstimate(
        flops=2 * B_pad * (S * H1 + H1 * H2 + H2 * A_pad),
        transcendentals=B_pad * (H1 + H2),
        bytes_accessed=(B_pad * S * itemsize            # x in
                        + B_pad * A_pad * 4             # means out (f32)
                        + (S * H1 + H1 * H2 + H2 * A_pad) * itemsize
                        + (H1 + H2 + A_pad) * 4),       # biases (f32)
    )

    resident = lambda i: (0, 0)  # weights/biases stay in VMEM across grid steps
    means_p = pl.pallas_call(
        _cts_policy_kernel,
        out_shape=jax.ShapeDtypeStruct((B_pad, A_pad), jnp.float32),
        grid=grid,
        in_specs=[
            pl.BlockSpec((TB, S), lambda i: (i, 0)),    # x tile streams
            pl.BlockSpec((S, H1), resident),
            pl.BlockSpec((1, H1), resident),
            pl.BlockSpec((H1, H2), resident),
            pl.BlockSpec((1, H2), resident),
            pl.BlockSpec((H2, A_pad), resident),
            pl.BlockSpec((1, A_pad), resident),
        ],
        out_specs=pl.BlockSpec((TB, A_pad), lambda i: (i, 0)),  # lane-dense store
        compiler_params=pltpu.CompilerParams(
            dimension_semantics=("parallel",),          # v7x: shard over both TCs
        ),
        cost_estimate=cost,
    )(x_p, w1, b1, w2, b2, w3p, b3p)

    means = means_p[:B, :A]
    # std = exp(log_stdev): batch-independent, 8 floats — plain XLA, not a kernel
    # output (removes a masked sub-128-lane store + an output DMA per grid step).
    std = jnp.exp(params["log_stdev"][0])
    return means, std


def init_cts_policy_params(key, state_dim, action_dim, hidden_sizes=(64, 64)):
    """Deterministic synthetic init (xavier-uniform-like for 2D, zeros for biases
    and log_stdev — matching `initialize_weights(..., 'xavier')` semantics)."""
    n_layers = len(hidden_sizes) + 1
    keys = jax.random.split(key, n_layers)

    def xavier(k, fan_in, fan_out):
        limit = (6.0 / (fan_in + fan_out)) ** 0.5
        # stored transposed as (in, out) so the kernel computes x @ W directly
        return jax.random.uniform(
            k, (fan_in, fan_out), minval=-limit, maxval=limit, dtype=jnp.float32
        )

    h1, h2 = hidden_sizes
    params = {
        "w1": xavier(keys[0], state_dim, h1),
        "b1": jnp.zeros((1, h1), jnp.float32),
        "w2": xavier(keys[1], h1, h2),
        "b2": jnp.zeros((1, h2), jnp.float32),
        "w3": xavier(keys[2], h2, action_dim),
        "b3": jnp.zeros((1, action_dim), jnp.float32),
        "log_stdev": jnp.zeros((1, action_dim), jnp.float32),
    }
    return params


def _reference_forward(x, params):
    """Pure-JAX reference of the PyTorch forward for correctness checking."""
    h = jnp.tanh(x @ params["w1"] + params["b1"])
    h = jnp.tanh(h @ params["w2"] + params["b2"])
    means = h @ params["w3"] + params["b3"]
    std = jnp.exp(params["log_stdev"][0])
    return means, std


if __name__ == "__main__":
    # Small shapes consistent with the module: batch=8, state_dim=16,
    # hidden=(64, 64), action_dim=8.
    batch, state_dim, action_dim = 8, 16, 8

    key = jax.random.PRNGKey(0)
    pkey, xkey, xkey2 = jax.random.split(key, 3)

    params = init_cts_policy_params(pkey, state_dim, action_dim)
    x = jax.random.normal(xkey, (batch, state_dim), dtype=jnp.float32)

    means, std = cts_policy_forward(x, params)
    jax.block_until_ready((means, std))

    ref_means, ref_std = _reference_forward(x, params)
    assert means.shape == (batch, action_dim)
    assert std.shape == (action_dim,)
    assert jnp.allclose(means, ref_means, atol=1e-5, rtol=1e-5)
    assert jnp.allclose(std, ref_std, atol=1e-6, rtol=1e-6)

    # Larger, non-tile-aligned batch to exercise the batch grid + padding path.
    big_batch = 1000
    xb = jax.random.normal(xkey2, (big_batch, state_dim), dtype=jnp.float32)
    means_b, std_b = cts_policy_forward(xb, params, block_batch=512)
    jax.block_until_ready((means_b, std_b))
    ref_means_b, _ = _reference_forward(xb, params)
    assert means_b.shape == (big_batch, action_dim)
    assert jnp.allclose(means_b, ref_means_b, atol=1e-5, rtol=1e-5)

    print("KERNEL_OK")
</pallas_src>

<mosaic_0001>
module attributes {stable_mosaic.version = 11 : i64} {
  func.func @_cts_policy_kernel(%arg0: i32, %arg1: memref<8x16xf32, #tpu.memory_space<vmem>>, %arg2: memref<16x64xf32, #tpu.memory_space<vmem>>, %arg3: memref<1x64xf32, #tpu.memory_space<vmem>>, %arg4: memref<64x64xf32, #tpu.memory_space<vmem>>, %arg5: memref<1x64xf32, #tpu.memory_space<vmem>>, %arg6: memref<64x128xf32, #tpu.memory_space<vmem>>, %arg7: memref<1x128xf32, #tpu.memory_space<vmem>>, %arg8: memref<8x128xf32, #tpu.memory_space<vmem>>) attributes {dimension_semantics = [#tpu.dimension_semantics<parallel>], iteration_bounds = array<i64: 1>, scalar_prefetch = 0 : i64, scratch_operands = 0 : i64, tpu.core_type = #tpu.core_type<tc>, window_params = [{transform_indices = @transform_0, window_bounds = array<i64: 8, 16>}, {pipeline_mode = #tpu.pipeline_mode<synchronous>, transform_indices = @transform_1, window_bounds = array<i64: 16, 64>}, {pipeline_mode = #tpu.pipeline_mode<synchronous>, transform_indices = @transform_2, window_bounds = array<i64: 1, 64>}, {pipeline_mode = #tpu.pipeline_mode<synchronous>, transform_indices = @transform_3, window_bounds = array<i64: 64, 64>}, {pipeline_mode = #tpu.pipeline_mode<synchronous>, transform_indices = @transform_4, window_bounds = array<i64: 1, 64>}, {pipeline_mode = #tpu.pipeline_mode<synchronous>, transform_indices = @transform_5, window_bounds = array<i64: 64, 128>}, {pipeline_mode = #tpu.pipeline_mode<synchronous>, transform_indices = @transform_6, window_bounds = array<i64: 1, 128>}, {transform_indices = @transform_7, window_bounds = array<i64: 8, 128>}]} {
    %c0 = arith.constant 0 : index
    %c0_0 = arith.constant 0 : index
    %0 = vector.load %arg1[%c0, %c0_0] : memref<8x16xf32, #tpu.memory_space<vmem>>, vector<8x16xf32>
    %c0_1 = arith.constant 0 : index
    %c0_2 = arith.constant 0 : index
    %1 = vector.load %arg2[%c0_1, %c0_2] : memref<16x64xf32, #tpu.memory_space<vmem>>, vector<16x64xf32>
    %cst = arith.constant dense<0.000000e+00> : vector<8x64xf32>
    %2 = tpu.matmul %0, %1, %cst {dimension_numbers = #tpu.dot_dimension_numbers<[1], [0], [0], [1], [0, 0, 1, 1], [], []>} : vector<8x16xf32>, vector<16x64xf32>, vector<8x64xf32> -> vector<8x64xf32>
    %c0_3 = arith.constant 0 : index
    %c0_4 = arith.constant 0 : index
    %3 = vector.load %arg3[%c0_3, %c0_4] : memref<1x64xf32, #tpu.memory_space<vmem>>, vector<1x64xf32>
    %4 = vector.broadcast %3 : vector<1x64xf32> to vector<8x64xf32>
    %5 = arith.addf %2, %4 : vector<8x64xf32>
    %6 = math.tanh %5 : vector<8x64xf32>
    %c0_5 = arith.constant 0 : index
    %c0_6 = arith.constant 0 : index
    %7 = vector.load %arg4[%c0_5, %c0_6] : memref<64x64xf32, #tpu.memory_space<vmem>>, vector<64x64xf32>
    %cst_7 = arith.constant dense<0.000000e+00> : vector<8x64xf32>
    %8 = tpu.matmul %6, %7, %cst_7 {dimension_numbers = #tpu.dot_dimension_numbers<[1], [0], [0], [1], [0, 0, 1, 1], [], []>} : vector<8x64xf32>, vector<64x64xf32>, vector<8x64xf32> -> vector<8x64xf32>
    %c0_8 = arith.constant 0 : index
    %c0_9 = arith.constant 0 : index
    %9 = vector.load %arg5[%c0_8, %c0_9] : memref<1x64xf32, #tpu.memory_space<vmem>>, vector<1x64xf32>
    %10 = vector.broadcast %9 : vector<1x64xf32> to vector<8x64xf32>
    %11 = arith.addf %8, %10 : vector<8x64xf32>
    %12 = math.tanh %11 : vector<8x64xf32>
    %c0_10 = arith.constant 0 : index
    %c0_11 = arith.constant 0 : index
    %13 = vector.load %arg6[%c0_10, %c0_11] : memref<64x128xf32, #tpu.memory_space<vmem>>, vector<64x128xf32>
    %cst_12 = arith.constant dense<0.000000e+00> : vector<8x128xf32>
    %14 = tpu.matmul %12, %13, %cst_12 {dimension_numbers = #tpu.dot_dimension_numbers<[1], [0], [0], [1], [0, 0, 1, 1], [], []>} : vector<8x64xf32>, vector<64x128xf32>, vector<8x128xf32> -> vector<8x128xf32>
    %c0_13 = arith.constant 0 : index
    %c0_14 = arith.constant 0 : index
    %15 = vector.load %arg7[%c0_13, %c0_14] : memref<1x128xf32, #tpu.memory_space<vmem>>, vector<1x128xf32>
    %16 = vector.broadcast %15 : vector<1x128xf32> to vector<8x128xf32>
    %17 = arith.addf %14, %16 : vector<8x128xf32>
    %c0_15 = arith.constant 0 : index
    %c0_16 = arith.constant 0 : index
    %18 = vector.load %arg8[%c0_15, %c0_16] : memref<8x128xf32, #tpu.memory_space<vmem>>, vector<8x128xf32>
    tpu.vector_store %arg8[%c0_15, %c0_16], %17 {strides = array<i32>} : memref<8x128xf32, #tpu.memory_space<vmem>>, vector<8x128xf32>,
    return
  }
  func.func @transform_0(%arg0: i32) -> (i32, i32) {
    %c0_i32 = arith.constant 0 : i32
    %c0_i32_0 = arith.constant 0 : i32
    return %arg0, %c0_i32 : i32, i32
  }
  func.func @transform_1(%arg0: i32) -> (i32, i32) {
    %c0_i32 = arith.constant 0 : i32
    %c0_i32_0 = arith.constant 0 : i32
    %c0_i32_1 = arith.constant 0 : i32
    return %c0_i32, %c0_i32_0 : i32, i32
  }
  func.func @transform_2(%arg0: i32) -> (i32, i32) {
    %c0_i32 = arith.constant 0 : i32
    %c0_i32_0 = arith.constant 0 : i32
    %c0_i32_1 = arith.constant 0 : i32
    return %c0_i32, %c0_i32_0 : i32, i32
  }
  func.func @transform_3(%arg0: i32) -> (i32, i32) {
    %c0_i32 = arith.constant 0 : i32
    %c0_i32_0 = arith.constant 0 : i32
    %c0_i32_1 = arith.constant 0 : i32
    return %c0_i32, %c0_i32_0 : i32, i32
  }
  func.func @transform_4(%arg0: i32) -> (i32, i32) {
    %c0_i32 = arith.constant 0 : i32
    %c0_i32_0 = arith.constant 0 : i32
    %c0_i32_1 = arith.constant 0 : i32
    return %c0_i32, %c0_i32_0 : i32, i32
  }
  func.func @transform_5(%arg0: i32) -> (i32, i32) {
    %c0_i32 = arith.constant 0 : i32
    %c0_i32_0 = arith.constant 0 : i32
    %c0_i32_1 = arith.constant 0 : i32
    return %c0_i32, %c0_i32_0 : i32, i32
  }
  func.func @transform_6(%arg0: i32) -> (i32, i32) {
    %c0_i32 = arith.constant 0 : i32
    %c0_i32_0 = arith.constant 0 : i32
    %c0_i32_1 = arith.constant 0 : i32
    return %c0_i32, %c0_i32_0 : i32, i32
  }
  func.func @transform_7(%arg0: i32) -> (i32, i32) {
    %c0_i32 = arith.constant 0 : i32
    %c0_i32_0 = arith.constant 0 : i32
    return %arg0, %c0_i32 : i32, i32
  }
}

</mosaic_0001>

<llo_original>
// kernel: tpu_custom_call.1
$region0: #{tpu_custom_call.1}
  #allocation0 [shape = 'u32[]', space=smem, size = 0x4, offset = 0x4, fixed_abs, tag = 'smem constant byte address 0x4 - core index']
  #allocation1 [shape = 'u32[144,128]{1,0:T(1,128)}', space=vmem, size = 0x12000, scoped, tag = 'internal scratch']
  %s0 = inlined_call_operand.hbm [shape: f32[8,16], index: 0, kind: input, shape index: {}]
  %s1 = inlined_call_operand.hbm [shape: f32[16,64], index: 1, kind: input, shape index: {}]
  %s2 = inlined_call_operand.vmem [shape: f32[1,64], index: 2, kind: input, shape index: {}]
  %s3 = inlined_call_operand.hbm [shape: f32[64,64], index: 3, kind: input, shape index: {}]
  %s4 = inlined_call_operand.vmem [shape: f32[1,64], index: 4, kind: input, shape index: {}]
  %s5 = inlined_call_operand.hbm [shape: f32[64,128], index: 5, kind: input, shape index: {}]
  %s6 = inlined_call_operand.vmem [shape: f32[1,128], index: 6, kind: input, shape index: {}]
  %s7 = inlined_call_operand.hbm [shape: f32[8,128], index: 7, kind: output, shape index: {}]
  %s8 = sld [smem:[#allocation0]]
  $region54: #{tpu_custom_call.1} parent=0
    _
  %s10 = ssub.s32 1, %s8
  %s11 = scalar_select 0, %s10, %s8
  $region1: #{tpu_custom_call.1} parent=0
    #allocation2 [shape = 'u8[4096]{0}', space=vmem, size = 0x1000, scoped, tag = 'input window, operand 0, single buffered']
    #allocation3 [shape = 's32[1]{0}', space=sflag, size = 0x4, scoped, tag = 'scoped memory for tpu_custom_call.1']
    #allocation4 [shape = 's32[1]{0}', space=sflag, size = 0x4, scoped, tag = 'scoped memory for tpu_custom_call.1']
    #allocation5 [shape = 'u8[8192]{0}', space=vmem, size = 0x2000, scoped, tag = 'input window, operand 1, single buffered']
    #allocation6 [shape = 's32[1]{0}', space=sflag, size = 0x4, scoped, tag = 'scoped memory for tpu_custom_call.1']
    #allocation7 [shape = 'u8[32768]{0}', space=vmem, size = 0x8000, scoped, tag = 'input window, operand 3, single buffered']
    #allocation8 [shape = 'u8[32768]{0}', space=vmem, size = 0x8000, scoped, tag = 'input window, operand 5, single buffered']
    #allocation9 [shape = 's32[1]{0}', space=sflag, size = 0x4, scoped, tag = 'scoped memory for tpu_custom_call.1']
    #allocation10 [shape = 'u8[4096]{0}', space=vmem, size = 0x1000, scoped, tag = 'output window, operand 0, single buffered']
    %12 = vsyncpa [#allocation3], 0
    %13 = vsyncpa [#allocation6], 0
    %14 = vsyncpa [#allocation9], 0
    %15 = vsyncpa [#allocation4], 0
    // Predicated region
    $region2: #{tpu_custom_call.1} parent=1 // pred_check
      _
    $region3: #{tpu_custom_call.1} parent=1 // pred_check_branch
      %17 = sbr.rel (0) target = $region5
    $region4: #{tpu_custom_call.1} parent=1 // pred_region
      %s19 = ssub.s32 128, 128
      %20 = vsyncadd [#allocation3], %s19
      %s22 = sshll.u32 [#allocation2], 4
      %s23 = int_to_ptr.vmem [resolvable:$true] %s22
      %25 = dma.hbm_to_vmem [thread:$0]  %s0, 128, %s23, [#allocation3]
    $region5: #{tpu_custom_call.1} parent=1 // pred_fallthru
      _
    // Predicated region
    $region6: #{tpu_custom_call.1} parent=1 // pred_check
      _
    $region7: #{tpu_custom_call.1} parent=1 // pred_check_branch
      %27 = sbr.rel (0) target = $region9
    $region8: #{tpu_custom_call.1} parent=1 // pred_region
      %s29 = ssub.s32 256, 256
      %30 = vsyncadd [#allocation6], %s29
      %s31 = sshll.u32 [#allocation5], 4
      %s32 = int_to_ptr.vmem [resolvable:$true] %s31
      %37 = dma.hbm_to_vmem [thread:$0]  %s1, 256, %s32, [#allocation6], 128, 128, 8
    $region9: #{tpu_custom_call.1} parent=1 // pred_fallthru
      _
    // Predicated region
    $region10: #{tpu_custom_call.1} parent=1 // pred_check
      _
    $region11: #{tpu_custom_call.1} parent=1 // pred_check_branch
      %39 = sbr.rel (0) target = $region13
    $region12: #{tpu_custom_call.1} parent=1 // pred_region
      _
    $region13: #{tpu_custom_call.1} parent=1 // pred_fallthru
      _
    // Predicated region
    $region14: #{tpu_custom_call.1} parent=1 // pred_check
      _
    $region15: #{tpu_custom_call.1} parent=1 // pred_check_branch
      %41 = sbr.rel (0) target = $region17
    $region16: #{tpu_custom_call.1} parent=1 // pred_region
      %s43 = ssub.s32 1024, 1024
      %44 = vsyncadd [#allocation6], %s43
      %s45 = sshll.u32 [#allocation7], 4
      %s46 = int_to_ptr.vmem [resolvable:$true] %s45
      %51 = dma.hbm_to_vmem [thread:$0]  %s3, 1024, %s46, [#allocation6], 128, 128, 8
    $region17: #{tpu_custom_call.1} parent=1 // pred_fallthru
      _
    // Predicated region
    $region18: #{tpu_custom_call.1} parent=1 // pred_check
      _
    $region19: #{tpu_custom_call.1} parent=1 // pred_check_branch
      %53 = sbr.rel (0) target = $region21
    $region20: #{tpu_custom_call.1} parent=1 // pred_region
      _
    $region21: #{tpu_custom_call.1} parent=1 // pred_fallthru
      _
    // Predicated region
    $region22: #{tpu_custom_call.1} parent=1 // pred_check
      _
    $region23: #{tpu_custom_call.1} parent=1 // pred_check_branch
      %55 = sbr.rel (0) target = $region25
    $region24: #{tpu_custom_call.1} parent=1 // pred_region
      %s57 = ssub.s32 1024, 1024
      %58 = vsyncadd [#allocation9], %s57
      %s59 = sshll.u32 [#allocation8], 4
      %s60 = int_to_ptr.vmem [resolvable:$true] %s59
      %65 = dma.hbm_to_vmem [thread:$0]  %s5, 1024, %s60, [#allocation9], 128, 128, 8
    $region25: #{tpu_custom_call.1} parent=1 // pred_fallthru
      _
    // Predicated region
    $region26: #{tpu_custom_call.1} parent=1 // pred_check
      _
    $region27: #{tpu_custom_call.1} parent=1 // pred_check_branch
      %67 = sbr.rel (0) target = $region29
    $region28: #{tpu_custom_call.1} parent=1 // pred_region
      _
    $region29: #{tpu_custom_call.1} parent=1 // pred_fallthru
      _
    // Predicated region
    $region30: #{tpu_custom_call.1} parent=1 // pred_check
      _
    $region31: #{tpu_custom_call.1} parent=1 // pred_check_branch
      %69 = sbr.rel (0) target = $region33
    $region32: #{tpu_custom_call.1} parent=1 // pred_region
      %70 = dma.done [#allocation3], 128
    $region33: #{tpu_custom_call.1} parent=1 // pred_fallthru
      _
    // Predicated region
    $region34: #{tpu_custom_call.1} parent=1 // pred_check
      _
    $region35: #{tpu_custom_call.1} parent=1 // pred_check_branch
      %72 = sbr.rel (0) target = $region37
    $region36: #{tpu_custom_call.1} parent=1 // pred_region
      %73 = dma.done [#allocation6], 256
    $region37: #{tpu_custom_call.1} parent=1 // pred_fallthru
      _
    // Predicated region
    $region38: #{tpu_custom_call.1} parent=1 // pred_check
      _
    $region39: #{tpu_custom_call.1} parent=1 // pred_check_branch
      %75 = sbr.rel (0) target = $region41
    $region40: #{tpu_custom_call.1} parent=1 // pred_region
      %76 = dma.done [#allocation6], 1024
    $region41: #{tpu_custom_call.1} parent=1 // pred_fallthru
      _
    // Predicated region
    $region42: #{tpu_custom_call.1} parent=1 // pred_check
      _
    $region43: #{tpu_custom_call.1} parent=1 // pred_check_branch
      %78 = sbr.rel (0) target = $region45
    $region44: #{tpu_custom_call.1} parent=1 // pred_region
      %79 = dma.done [#allocation9], 1024
    $region45: #{tpu_custom_call.1} parent=1 // pred_fallthru
      _
    %v80 = vld [vmem:[#allocation2] sm:$0xff]
    %v81 = vld [vmem:[#allocation5] sm:$0xff]
    %v82 = vld [vmem:[#allocation5 + $0x8] sm:$0xff]
    %v83 = vld [vmem:[%s2] sm:$0x1]
    %v85 = vlaneseq
    %v86 = vshrl.u32 %v85, 7
    %v87 = vsub.s32 0, %v86
    %v88 = vrot.slane %v83, %v87
    %vm90 = vcmask 130048
    %v92 = vsel %vm90, %v80, 0
    %94 = vmatprep.subr.mxu0 0.0
    %95 = vmatpush1.msra.mxu0 0.0
    %96 = vmatprep.subr.mxu0 0.0
    %97 = vmatpush1.msra.mxu0 0.0
    %98 = vmatprep.subr.mxu0 0.0
    %99 = vmatpush1.msra.mxu0 0.0
    %100 = vmatprep.subr.mxu0 0.0
    %101 = vmatpush1.msra.mxu0 0.0
    %102 = vmatprep.subr.mxu0 0.0
    %103 = vmatpush1.msra.mxu0 0.0
    %104 = vmatprep.subr.mxu0 0.0
    %105 = vmatpush1.msra.mxu0 0.0
    %106 = vmatprep.subr.mxu0 0.0
    %107 = vmatpush1.msra.mxu0 0.0
    %108 = vmatprep.subr.mxu0 0.0
    %109 = vmatpush1.msra.mxu0 0.0
    %110 = vmatprep.subr.mxu0 0.0
    %111 = vmatpush1.msra.mxu0 0.0
    %112 = vmatprep.subr.mxu0 0.0
    %113 = vmatpush1.msra.mxu0 0.0
    %114 = vmatprep.subr.mxu0 0.0
    %115 = vmatpush1.msra.mxu0 0.0
    %116 = vmatprep.subr.mxu0 0.0
    %117 = vmatpush1.msra.mxu0 0.0
    %118 = vmatprep.subr.mxu0 0.0
    %119 = vmatpush1.msra.mxu0 0.0
    %120 = vmatprep.subr.mxu0 0.0
    %121 = vmatpush1.msra.mxu0 0.0
    %122 = vmatprep.subr.mxu0 0.0
    %123 = vmatpush1.msra.mxu0 %v82
    %124 = vmatprep.subr.mxu0 0.0
    %125 = vmatpush1.msra.mxu0 %v81
    %126 = vmatprep.subr.mxu0 0.0
    %127 = vmatpush2.msra.mxu0 0.0
    %128 = vmatprep.subr.mxu0 0.0
    %129 = vmatpush2.msra.mxu0 0.0
    %130 = vmatprep.subr.mxu0 0.0
    %131 = vmatpush2.msra.mxu0 0.0
    %132 = vmatprep.subr.mxu0 0.0
    %133 = vmatpush2.msra.mxu0 0.0
    %134 = vmatprep.subr.mxu0 0.0
    %135 = vmatpush2.msra.mxu0 0.0
    %136 = vmatprep.subr.mxu0 0.0
    %137 = vmatpush2.msra.mxu0 0.0
    %138 = vmatprep.subr.mxu0 0.0
    %139 = vmatpush2.msra.mxu0 0.0
    %140 = vmatprep.subr.mxu0 0.0
    %141 = vmatpush2.msra.mxu0 0.0
    %142 = vmatprep.subr.mxu0 0.0
    %143 = vmatpush2.msra.mxu0 0.0
    %144 = vmatprep.subr.mxu0 0.0
    %145 = vmatpush2.msra.mxu0 0.0
    %146 = vmatprep.subr.mxu0 0.0
    %147 = vmatpush2.msra.mxu0 0.0
    %148 = vmatprep.subr.mxu0 0.0
    %149 = vmatpush2.msra.mxu0 0.0
    %150 = vmatprep.subr.mxu0 0.0
    %151 = vmatpush2.msra.mxu0 0.0
    %152 = vmatprep.subr.mxu0 0.0
    %153 = vmatpush2.msra.mxu0 0.0
    %154 = vmatprep.subr.mxu0 0.0
    %155 = vmatpush2.msra.mxu0 0.0
    %156 = vmatprep.subr.mxu0 0.0
    %157 = vmatpush2.msra.mxu0 0.0
    %158 = vmatprep.mubr.f32.mxu0 0.0
    %159 = vmatmul.mubr.f32.gmra.mxu0 %v92
    %v160 = vpop.f32.mrf.mxu0
    %v161 = vadd.f32 %v88, %v160
    %v162 = vpop.f32.mrf.mxu0
    %163 = vdwg.mxu0
    %v164 = vtanh.pop %v161
    %v165 = vld [vmem:[#allocation7] sm:$0xff]
    %v166 = vld [vmem:[#allocation7 + $0x8] sm:$0xff]
    %v167 = vld [vmem:[#allocation7 + $0x10] sm:$0xff]
    %v168 = vld [vmem:[#allocation7 + $0x18] sm:$0xff]
    %v169 = vld [vmem:[#allocation7 + $0x20] sm:$0xff]
    %v170 = vld [vmem:[#allocation7 + $0x28] sm:$0xff]
    %v171 = vld [vmem:[#allocation7 + $0x30] sm:$0xff]
    %v172 = vld [vmem:[#allocation7 + $0x38] sm:$0xff]
    %v173 = vld [vmem:[%s4] sm:$0x1]
    %v175 = vlaneseq
    %v176 = vshrl.u32 %v175, 7
    %v177 = vsub.s32 0, %v176
    %v178 = vrot.slane %v173, %v177
    %vm180 = vcmask 523264
    %v182 = vsel %vm180, %v164, 0
    %184 = vmatprep.subr.mxu0 0.0
    %185 = vmatpush1.msra.mxu0 0.0
    %186 = vmatprep.subr.mxu0 0.0
    %187 = vmatpush1.msra.mxu0 0.0
    %188 = vmatprep.subr.mxu0 0.0
    %189 = vmatpush1.msra.mxu0 0.0
    %190 = vmatprep.subr.mxu0 0.0
    %191 = vmatpush1.msra.mxu0 0.0
    %192 = vmatprep.subr.mxu0 0.0
    %193 = vmatpush1.msra.mxu0 0.0
    %194 = vmatprep.subr.mxu0 0.0
    %195 = vmatpush1.msra.mxu0 0.0
    %196 = vmatprep.subr.mxu0 0.0
    %197 = vmatpush1.msra.mxu0 0.0
    %198 = vmatprep.subr.mxu0 0.0
    %199 = vmatpush1.msra.mxu0 0.0
    %200 = vmatprep.subr.mxu0 0.0
    %201 = vmatpush1.msra.mxu0 %v172
    %202 = vmatprep.subr.mxu0 0.0
    %203 = vmatpush1.msra.mxu0 %v171
    %204 = vmatprep.subr.mxu0 0.0
    %205 = vmatpush1.msra.mxu0 %v170
    %206 = vmatprep.subr.mxu0 0.0
    %207 = vmatpush1.msra.mxu0 %v169
    %208 = vmatprep.subr.mxu0 0.0
    %209 = vmatpush1.msra.mxu0 %v168
    %210 = vmatprep.subr.mxu0 0.0
    %211 = vmatpush1.msra.mxu0 %v167
    %212 = vmatprep.subr.mxu0 0.0
    %213 = vmatpush1.msra.mxu0 %v166
    %214 = vmatprep.subr.mxu0 0.0
    %215 = vmatpush1.msra.mxu0 %v165
    %216 = vmatprep.subr.mxu0 0.0
    %217 = vmatpush2.msra.mxu0 0.0
    %218 = vmatprep.subr.mxu0 0.0
    %219 = vmatpush2.msra.mxu0 0.0
    %220 = vmatprep.subr.mxu0 0.0
    %221 = vmatpush2.msra.mxu0 0.0
    %222 = vmatprep.subr.mxu0 0.0
    %223 = vmatpush2.msra.mxu0 0.0
    %224 = vmatprep.subr.mxu0 0.0
    %225 = vmatpush2.msra.mxu0 0.0
    %226 = vmatprep.subr.mxu0 0.0
    %227 = vmatpush2.msra.mxu0 0.0
    %228 = vmatprep.subr.mxu0 0.0
    %229 = vmatpush2.msra.mxu0 0.0
    %230 = vmatprep.subr.mxu0 0.0
    %231 = vmatpush2.msra.mxu0 0.0
    %232 = vmatprep.subr.mxu0 0.0
    %233 = vmatpush2.msra.mxu0 0.0
    %234 = vmatprep.subr.mxu0 0.0
    %235 = vmatpush2.msra.mxu0 0.0
    %236 = vmatprep.subr.mxu0 0.0
    %237 = vmatpush2.msra.mxu0 0.0
    %238 = vmatprep.subr.mxu0 0.0
    %239 = vmatpush2.msra.mxu0 0.0
    %240 = vmatprep.subr.mxu0 0.0
    %241 = vmatpush2.msra.mxu0 0.0
    %242 = vmatprep.subr.mxu0 0.0
    %243 = vmatpush2.msra.mxu0 0.0
    %244 = vmatprep.subr.mxu0 0.0
    %245 = vmatpush2.msra.mxu0 0.0
    %246 = vmatprep.subr.mxu0 0.0
    %247 = vmatpush2.msra.mxu0 0.0
    %248 = vmatprep.mubr.f32.mxu0 0.0
    %249 = vmatmul.mubr.f32.gmra.mxu0 %v182
    %v250 = vpop.f32.mrf.mxu0
    %v251 = vadd.f32 %v178, %v250
    %v252 = vpop.f32.mrf.mxu0
    %253 = vdwg.mxu0
    %v254 = vtanh.pop %v251
    %v255 = vld [vmem:[#allocation8] sm:$0xff]
    %v256 = vld [vmem:[#allocation8 + $0x8] sm:$0xff]
    %v257 = vld [vmem:[#allocation8 + $0x10] sm:$0xff]
    %v258 = vld [vmem:[#allocation8 + $0x18] sm:$0xff]
    %v259 = vld [vmem:[#allocation8 + $0x20] sm:$0xff]
    %v260 = vld [vmem:[#allocation8 + $0x28] sm:$0xff]
    %v261 = vld [vmem:[#allocation8 + $0x30] sm:$0xff]
    %v262 = vld [vmem:[#allocation8 + $0x38] sm:$0xff]
    %v263 = vld [vmem:[%s6] sm:$0x1]
    %v265 = vlaneseq
    %v266 = vshrl.u32 %v265, 7
    %v267 = vsub.s32 0, %v266
    %v268 = vrot.slane %v263, %v267
    %v271 = vsel %vm180, %v254, 0
    %273 = vmatprep.subr.mxu0 0.0
    %274 = vmatpush1.msra.mxu0 0.0
    %275 = vmatprep.subr.mxu0 0.0
    %276 = vmatpush1.msra.mxu0 0.0
    %277 = vmatprep.subr.mxu0 0.0
    %278 = vmatpush1.msra.mxu0 0.0
    %279 = vmatprep.subr.mxu0 0.0
    %280 = vmatpush1.msra.mxu0 0.0
    %281 = vmatprep.subr.mxu0 0.0
    %282 = vmatpush1.msra.mxu0 0.0
    %283 = vmatprep.subr.mxu0 0.0
    %284 = vmatpush1.msra.mxu0 0.0
    %285 = vmatprep.subr.mxu0 0.0
    %286 = vmatpush1.msra.mxu0 0.0
    %287 = vmatprep.subr.mxu0 0.0
    %288 = vmatpush1.msra.mxu0 0.0
    %289 = vmatprep.subr.mxu0 0.0
    %290 = vmatpush1.msra.mxu0 %v262
    %291 = vmatprep.subr.mxu0 0.0
    %292 = vmatpush1.msra.mxu0 %v261
    %293 = vmatprep.subr.mxu0 0.0
    %294 = vmatpush1.msra.mxu0 %v260
    %295 = vmatprep.subr.mxu0 0.0
    %296 = vmatpush1.msra.mxu0 %v259
    %297 = vmatprep.subr.mxu0 0.0
    %298 = vmatpush1.msra.mxu0 %v258
    %299 = vmatprep.subr.mxu0 0.0
    %300 = vmatpush1.msra.mxu0 %v257
    %301 = vmatprep.subr.mxu0 0.0
    %302 = vmatpush1.msra.mxu0 %v256
    %303 = vmatprep.subr.mxu0 0.0
    %304 = vmatpush1.msra.mxu0 %v255
    %305 = vmatprep.subr.mxu0 0.0
    %306 = vmatpush2.msra.mxu0 0.0
    %307 = vmatprep.subr.mxu0 0.0
    %308 = vmatpush2.msra.mxu0 0.0
    %309 = vmatprep.subr.mxu0 0.0
    %310 = vmatpush2.msra.mxu0 0.0
    %311 = vmatprep.subr.mxu0 0.0
    %312 = vmatpush2.msra.mxu0 0.0
    %313 = vmatprep.subr.mxu0 0.0
    %314 = vmatpush2.msra.mxu0 0.0
    %315 = vmatprep.subr.mxu0 0.0
    %316 = vmatpush2.msra.mxu0 0.0
    %317 = vmatprep.subr.mxu0 0.0
    %318 = vmatpush2.msra.mxu0 0.0
    %319 = vmatprep.subr.mxu0 0.0
    %320 = vmatpush2.msra.mxu0 0.0
    %321 = vmatprep.subr.mxu0 0.0
    %322 = vmatpush2.msra.mxu0 0.0
    %323 = vmatprep.subr.mxu0 0.0
    %324 = vmatpush2.msra.mxu0 0.0
    %325 = vmatprep.subr.mxu0 0.0
    %326 = vmatpush2.msra.mxu0 0.0
    %327 = vmatprep.subr.mxu0 0.0
    %328 = vmatpush2.msra.mxu0 0.0
    %329 = vmatprep.subr.mxu0 0.0
    %330 = vmatpush2.msra.mxu0 0.0
    %331 = vmatprep.subr.mxu0 0.0
    %332 = vmatpush2.msra.mxu0 0.0
    %333 = vmatprep.subr.mxu0 0.0
    %334 = vmatpush2.msra.mxu0 0.0
    %335 = vmatprep.subr.mxu0 0.0
    %336 = vmatpush2.msra.mxu0 0.0
    %337 = vmatprep.mubr.f32.mxu0 0.0
    %338 = vmatmul.mubr.f32.gmra.mxu0 %v271
    %v339 = vpop.f32.mrf.mxu0
    %v340 = vadd.f32 %v268, %v339
    %v341 = vpop.f32.mrf.mxu0
    %342 = vdwg.mxu0
    %343 = vst [vmem:[#allocation10] sm:$0xff] %v340
    // Predicated region
    $region46: #{tpu_custom_call.1} parent=1 // pred_check
      _
    $region47: #{tpu_custom_call.1} parent=1 // pred_check_branch
      %345 = sbr.rel (0) target = $region49
    $region48: #{tpu_custom_call.1} parent=1 // pred_region
      %s347 = ssub.s32 128, 128
      %348 = vsyncadd [#allocation4], %s347
      %s350 = sshll.u32 [#allocation10], 4
      %s351 = int_to_ptr.vmem [resolvable:$true] %s350
      %353 = dma.vmem_to_hbm [thread:$0]  %s351, 128, %s7, [#allocation4]
    $region49: #{tpu_custom_call.1} parent=1 // pred_fallthru
      _
    // Predicated region
    $region50: #{tpu_custom_call.1} parent=1 // pred_check
      _
    $region51: #{tpu_custom_call.1} parent=1 // pred_check_branch
      %355 = sbr.rel (0) target = $region53
    $region52: #{tpu_custom_call.1} parent=1 // pred_region
      %356 = dma.done [#allocation4], 128
    $region53: #{tpu_custom_call.1} parent=1 // pred_fallthru
      _
    %357 = vsyncpa [#allocation3], 1
    %358 = vsyncpa [#allocation6], 1
    %359 = vsyncpa [#allocation9], 1
    %360 = vsyncpa [#allocation4], 1

</llo_original>
